<compile_context>
chip_gen: v7x
topology: tpu7x:2x2x1
jax: 0.10.0
libtpu: 0.0.40
codegen_flags: <defaults>
</compile_context>

<pallas_src>
import functools

import jax
import jax.numpy as jnp
from jax.experimental import pallas as pl
from jax.experimental.pallas import tpu as pltpu

NUM_BOND_TYPE = 7
NUM_BOND_DIRECTION = 3
NUM_ATOM_TYPE = 121
NUM_CHIRALITY_TAG = 11
BN_EPS = 1e-5


def _round_up(x, m):
    return (x + m - 1) // m * m


# ---------------------------------------------------------------------------
# Pallas kernel: all GIN layers fused, grid = (num_layer,)
# ---------------------------------------------------------------------------
def fused_gin_kernel(h0_ref, a_ref, e_ref, w1_ref, b1_ref, w2_ref, b2_ref,
                     gamma_ref, beta_ref, o_ref, h_scr, *, n_real: int):
    l = pl.program_id(0)

    # load the initial node features into the carried VMEM state on the first layer
    @pl.when(l == 0)
    def _():
        h_scr[...] = h0_ref[...]

    h = h_scr[...]                                                   # (Np, Dp) f32

    # aggregation: adjacency matmul (bf16 A, f32 accumulate) + precomputed edge sum
    a = a_ref[...].astype(jnp.float32)                               # (Np, Np)
    aggr = jnp.dot(a, h, preferred_element_type=jnp.float32) + e_ref[0]

    # GIN MLP: Linear(D, 2D) -> ReLU -> Linear(2D, D)   (bias folded into dot epilogue)
    z1 = jnp.maximum(
        jnp.dot(aggr, w1_ref[0], preferred_element_type=jnp.float32) + b1_ref[0], 0.0)
    z2 = jnp.dot(z1, w2_ref[0], preferred_element_type=jnp.float32) + b2_ref[0]

    # BatchNorm1d (training-mode batch stats, biased variance) over the REAL rows only
    n_pad = z2.shape[0]
    inv_n = 1.0 / n_real
    if n_pad != n_real:
        rows = jax.lax.broadcasted_iota(jnp.int32, (n_pad, 1), 0)
        mask = (rows < n_real).astype(jnp.float32)                   # (Np, 1)
        zm = z2 * mask
    else:
        mask = None
        zm = z2
    mean = jnp.sum(zm, axis=0, keepdims=True) * inv_n
    centered = z2 - mean
    sq = centered * centered
    if mask is not None:
        sq = sq * mask
    var = jnp.sum(sq, axis=0, keepdims=True) * inv_n
    out = centered * jax.lax.rsqrt(var + BN_EPS) * gamma_ref[0] + beta_ref[0]
    if mask is not None:
        out = out * mask                                             # keep pad rows at 0

    # JK='last': output block is resident (constant index); final HBM writeback is the
    # last layer's BN output WITHOUT relu (dropout p=0 is identity).
    o_ref[...] = out
    # relu'd activation feeds the next layer (unused after the last layer)
    h_scr[...] = jnp.maximum(out, 0.0)


# ---------------------------------------------------------------------------
# Parameter construction (deterministic, synthetic)
# ---------------------------------------------------------------------------
def xavier_uniform(key, shape):
    fan_in, fan_out = shape[0], shape[1]
    a = jnp.sqrt(6.0 / (fan_in + fan_out))
    return jax.random.uniform(key, shape, jnp.float32, -a, a)


def init_params(key, num_layer, emb_dim):
    keys = jax.random.split(key, 2 + 6 * num_layer)
    params = {
        "x_emb1": xavier_uniform(keys[0], (NUM_ATOM_TYPE, emb_dim)),
        "x_emb2": xavier_uniform(keys[1], (NUM_CHIRALITY_TAG, emb_dim)),
        "layers": [],
    }
    for l in range(num_layer):
        k = keys[2 + 6 * l: 2 + 6 * (l + 1)]
        layer = {
            "edge_emb1": xavier_uniform(k[0], (NUM_BOND_TYPE, emb_dim)),
            "edge_emb2": xavier_uniform(k[1], (NUM_BOND_DIRECTION, emb_dim)),
            "w1": xavier_uniform(k[2], (emb_dim, 2 * emb_dim)),
            "b1": jax.random.uniform(k[3], (1, 2 * emb_dim), jnp.float32, -0.1, 0.1),
            "w2": xavier_uniform(k[4], (2 * emb_dim, emb_dim)),
            "b2": jax.random.uniform(k[5], (1, emb_dim), jnp.float32, -0.1, 0.1),
            "gamma": jnp.ones((1, emb_dim), jnp.float32),
            "beta": jnp.zeros((1, emb_dim), jnp.float32),
        }
        params["layers"].append(layer)
    return params


# ---------------------------------------------------------------------------
# GNN forward (glue in JAX, hot path in a single fused Pallas kernel)
# ---------------------------------------------------------------------------
def _pad2(a, rows, cols):
    return jnp.pad(a, ((0, rows - a.shape[0]), (0, cols - a.shape[1])))


def gnn_forward(params, x, edge_index, edge_attr, num_layer):
    N = x.shape[0]
    D = params["x_emb1"].shape[1]
    H = 2 * D
    L = num_layer
    Np = _round_up(N, 8)
    Dp = _round_up(D, 128)
    Hp = _round_up(H, 128)

    # node embedding lookup (glue)
    h0 = jnp.take(params["x_emb1"], x[:, 0], axis=0) + \
         jnp.take(params["x_emb2"], x[:, 1], axis=0)                 # (N, D)

    # add self loops (same for every layer)
    self_loops = jnp.arange(N, dtype=edge_index.dtype)
    src = jnp.concatenate([edge_index[0], self_loops])               # (E+N,)
    dst = jnp.concatenate([edge_index[1], self_loops])               # (E+N,)

    # self-loop edge attributes: bond type 4, direction 0
    self_loop_attr = jnp.concatenate(
        [jnp.full((N, 1), 4, edge_attr.dtype), jnp.zeros((N, 1), edge_attr.dtype)],
        axis=1)
    ea = jnp.concatenate([edge_attr, self_loop_attr], axis=0)        # (E+N, 2)

    # dense adjacency with self loops; parallel-edge counts preserved (needed for 'add')
    A = jnp.zeros((N, N), jnp.float32).at[dst, src].add(1.0)         # (N, N)

    # per-layer aggregated edge embeddings: e_agg[l, i] = sum_{e: dst(e)=i} e_emb_l[e]
    e_aggs = []
    for l in range(L):
        lp = params["layers"][l]
        e_emb = jnp.take(lp["edge_emb1"], ea[:, 0], axis=0) + \
                jnp.take(lp["edge_emb2"], ea[:, 1], axis=0)          # (E+N, D)
        e_aggs.append(jax.ops.segment_sum(e_emb, dst, num_segments=N))
    e_agg = jnp.stack(e_aggs)                                        # (L, N, D)

    # pad to lane/sublane-friendly shapes and stack per-layer params
    h0_p = _pad2(h0, Np, Dp)
    A_p = _pad2(A, Np, Np).astype(jnp.bfloat16)
    e_p = jnp.pad(e_agg, ((0, 0), (0, Np - N), (0, Dp - D)))
    W1 = jnp.stack([_pad2(lp["w1"], Dp, Hp) for lp in params["layers"]])
    B1 = jnp.stack([_pad2(lp["b1"], 1, Hp) for lp in params["layers"]])
    W2 = jnp.stack([_pad2(lp["w2"], Hp, Dp) for lp in params["layers"]])
    B2 = jnp.stack([_pad2(lp["b2"], 1, Dp) for lp in params["layers"]])
    GM = jnp.stack([_pad2(lp["gamma"], 1, Dp) for lp in params["layers"]])
    BT = jnp.stack([_pad2(lp["beta"], 1, Dp) for lp in params["layers"]])

    # rough VMEM budget check (double buffering on the streamed per-layer blocks)
    vmem_est = (
        Np * Dp * 4                    # h0
        + Np * Np * 2                  # A (bf16)
        + 2 * (Np * Dp * 4)            # e_agg block x2
        + 2 * (Dp * Hp * 4 + Hp * Dp * 4 + (Hp + 3 * Dp) * 4)   # weights/biases x2
        + 2 * (Np * Dp * 4)            # output block
        + Np * Dp * 4                  # h scratch
    )
    vmem_limit = 32 * 1024 * 1024      # safe on v5e/v6e (128 MiB) and v7x (64 MiB)
    assert vmem_est < vmem_limit // 2, f"VMEM estimate {vmem_est} too large"

    kernel = functools.partial(fused_gin_kernel, n_real=N)
    out_p = pl.pallas_call(
        kernel,
        out_shape=jax.ShapeDtypeStruct((Np, Dp), jnp.float32),
        grid_spec=pltpu.PrefetchScalarGridSpec(
            num_scalar_prefetch=0,
            grid=(L,),
            in_specs=[
                pl.BlockSpec((Np, Dp), lambda l: (0, 0)),        # h0 (resident)
                pl.BlockSpec((Np, Np), lambda l: (0, 0)),        # A  (resident, bf16)
                pl.BlockSpec((1, Np, Dp), lambda l: (l, 0, 0)),  # e_agg (per layer)
                pl.BlockSpec((1, Dp, Hp), lambda l: (l, 0, 0)),  # W1
                pl.BlockSpec((1, 1, Hp), lambda l: (l, 0, 0)),   # b1
                pl.BlockSpec((1, Hp, Dp), lambda l: (l, 0, 0)),  # W2
                pl.BlockSpec((1, 1, Dp), lambda l: (l, 0, 0)),   # b2
                pl.BlockSpec((1, 1, Dp), lambda l: (l, 0, 0)),   # gamma
                pl.BlockSpec((1, 1, Dp), lambda l: (l, 0, 0)),   # beta
            ],
            out_specs=pl.BlockSpec((Np, Dp), lambda l: (0, 0)),  # resident, JK='last'
            scratch_shapes=[pltpu.VMEM((Np, Dp), jnp.float32)],
        ),
        compiler_params=pltpu.CompilerParams(
            dimension_semantics=("arbitrary",),       # layers are sequential
            vmem_limit_bytes=vmem_limit,
        ),
    )(h0_p, A_p, e_p, W1, B1, W2, B2, GM, BT)

    return out_p[:N, :D]


# pure-JAX reference for verification
def gnn_forward_ref(params, x, edge_index, edge_attr, num_layer):
    N = x.shape[0]
    h = jnp.take(params["x_emb1"], x[:, 0], axis=0) + \
        jnp.take(params["x_emb2"], x[:, 1], axis=0)
    self_loops = jnp.arange(N, dtype=edge_index.dtype)
    src = jnp.concatenate([edge_index[0], self_loops])
    dst = jnp.concatenate([edge_index[1], self_loops])
    self_loop_attr = jnp.concatenate(
        [jnp.full((N, 1), 4, edge_attr.dtype), jnp.zeros((N, 1), edge_attr.dtype)], axis=1)
    ea = jnp.concatenate([edge_attr, self_loop_attr], axis=0)
    for layer in range(num_layer):
        lp = params["layers"][layer]
        e_emb = jnp.take(lp["edge_emb1"], ea[:, 0], axis=0) + \
                jnp.take(lp["edge_emb2"], ea[:, 1], axis=0)
        msg = h[src] + e_emb
        aggr = jax.ops.segment_sum(msg, dst, num_segments=N)
        z = jnp.maximum(aggr @ lp["w1"] + lp["b1"], 0.0) @ lp["w2"] + lp["b2"]
        mean = z.mean(0, keepdims=True)
        var = ((z - mean) ** 2).mean(0, keepdims=True)
        h = (z - mean) * jax.lax.rsqrt(var + BN_EPS) * lp["gamma"] + lp["beta"]
        if layer != num_layer - 1:
            h = jnp.maximum(h, 0.0)
    return h


if __name__ == "__main__":
    num_layer = 3
    emb_dim = 32
    N = 30   # nodes (not a multiple of 8 -> exercises the padded-row BN mask)
    E = 48   # edges

    key = jax.random.PRNGKey(0)
    kp, kx1, kx2, ke, ka1, ka2 = jax.random.split(key, 6)

    params = init_params(kp, num_layer, emb_dim)

    # node features: (N, 2) int  [atom_type, chirality]
    x = jnp.stack([
        jax.random.randint(kx1, (N,), 0, NUM_ATOM_TYPE),
        jax.random.randint(kx2, (N,), 0, NUM_CHIRALITY_TAG),
    ], axis=1).astype(jnp.int32)

    # edge_index: (2, E) int; edge_attr: (E, 2) int [bond_type, bond_direction]
    edge_index = jax.random.randint(ke, (2, E), 0, N).astype(jnp.int32)
    edge_attr = jnp.stack([
        jax.random.randint(ka1, (E,), 0, NUM_BOND_TYPE),
        jax.random.randint(ka2, (E,), 0, NUM_BOND_DIRECTION),
    ], axis=1).astype(jnp.int32)

    out = gnn_forward(params, x, edge_index, edge_attr, num_layer)
    out = jax.block_until_ready(out)

    ref = gnn_forward_ref(params, x, edge_index, edge_attr, num_layer)
    assert out.shape == (N, emb_dim)
    assert jnp.allclose(out, ref, atol=1e-4, rtol=1e-4), "mismatch vs JAX reference"

    print("KERNEL_OK")
</pallas_src>

<mosaic_0001>
module attributes {stable_mosaic.version = 11 : i64} {
  func.func @fused_gin_kernel(%arg0: i32, %arg1: memref<32x128xf32, #tpu.memory_space<vmem>>, %arg2: memref<32x32xbf16, #tpu.memory_space<vmem>>, %arg3: memref<1x32x128xf32, #tpu.memory_space<vmem>>, %arg4: memref<1x128x128xf32, #tpu.memory_space<vmem>>, %arg5: memref<1x1x128xf32, #tpu.memory_space<vmem>>, %arg6: memref<1x128x128xf32, #tpu.memory_space<vmem>>, %arg7: memref<1x1x128xf32, #tpu.memory_space<vmem>>, %arg8: memref<1x1x128xf32, #tpu.memory_space<vmem>>, %arg9: memref<1x1x128xf32, #tpu.memory_space<vmem>>, %arg10: memref<32x128xf32, #tpu.memory_space<vmem>>, %arg11: memref<32x128xf32, #tpu.memory_space<vmem>>) attributes {dimension_semantics = [#tpu.dimension_semantics<arbitrary>], iteration_bounds = array<i64: 3>, scalar_prefetch = 0 : i64, scratch_operands = 1 : i64, tpu.core_type = #tpu.core_type<tc>, window_params = [{pipeline_mode = #tpu.pipeline_mode<synchronous>, transform_indices = @transform_0, window_bounds = array<i64: 32, 128>}, {pipeline_mode = #tpu.pipeline_mode<synchronous>, transform_indices = @transform_1, window_bounds = array<i64: 32, 32>}, {transform_indices = @transform_2, window_bounds = array<i64: 1, 32, 128>}, {transform_indices = @transform_3, window_bounds = array<i64: 1, 128, 128>}, {transform_indices = @transform_4, window_bounds = array<i64: 1, 1, 128>}, {transform_indices = @transform_5, window_bounds = array<i64: 1, 128, 128>}, {transform_indices = @transform_6, window_bounds = array<i64: 1, 1, 128>}, {transform_indices = @transform_7, window_bounds = array<i64: 1, 1, 128>}, {transform_indices = @transform_8, window_bounds = array<i64: 1, 1, 128>}, {pipeline_mode = #tpu.pipeline_mode<synchronous>, transform_indices = @transform_9, window_bounds = array<i64: 32, 128>}]} {
    %c0_i32 = arith.constant 0 : i32
    %0 = arith.cmpi eq, %arg0, %c0_i32 : i32
    %1 = arith.extui %0 : i1 to i32
    %c0_i32_0 = arith.constant 0 : i32
    %2 = arith.cmpi ne, %1, %c0_i32_0 : i32
    scf.if %2 {
      %c0_38 = arith.constant 0 : index
      %c0_39 = arith.constant 0 : index
      %65 = vector.load %arg1[%c0_38, %c0_39] : memref<32x128xf32, #tpu.memory_space<vmem>>, vector<32x128xf32>
      %c0_40 = arith.constant 0 : index
      %c0_41 = arith.constant 0 : index
      %66 = vector.load %arg11[%c0_40, %c0_41] : memref<32x128xf32, #tpu.memory_space<vmem>>, vector<32x128xf32>
      tpu.vector_store %arg11[%c0_40, %c0_41], %65 {strides = array<i32>} : memref<32x128xf32, #tpu.memory_space<vmem>>, vector<32x128xf32>,
    } else {
    }
    %c0 = arith.constant 0 : index
    %c0_1 = arith.constant 0 : index
    %3 = vector.load %arg11[%c0, %c0_1] : memref<32x128xf32, #tpu.memory_space<vmem>>, vector<32x128xf32>
    %c0_2 = arith.constant 0 : index
    %c0_3 = arith.constant 0 : index
    %4 = vector.load %arg2[%c0_2, %c0_3] : memref<32x32xbf16, #tpu.memory_space<vmem>>, vector<32x32xbf16>
    %5 = arith.extf %4 : vector<32x32xbf16> to vector<32x32xf32>
    %cst = arith.constant dense<0.000000e+00> : vector<32x128xf32>
    %6 = tpu.matmul %5, %3, %cst {dimension_numbers = #tpu.dot_dimension_numbers<[1], [0], [0], [1], [0, 0, 1, 1], [], []>} : vector<32x32xf32>, vector<32x128xf32>, vector<32x128xf32> -> vector<32x128xf32>
    %c0_4 = arith.constant 0 : index
    %c0_5 = arith.constant 0 : index
    %c0_6 = arith.constant 0 : index
    %7 = vector.load %arg3[%c0_4, %c0_5, %c0_6] : memref<1x32x128xf32, #tpu.memory_space<vmem>>, vector<1x32x128xf32>
    %8 = vector.shape_cast %7 : vector<1x32x128xf32> to vector<32x128xf32>
    %9 = arith.addf %6, %8 : vector<32x128xf32>
    %c0_7 = arith.constant 0 : index
    %c0_8 = arith.constant 0 : index
    %c0_9 = arith.constant 0 : index
    %10 = vector.load %arg4[%c0_7, %c0_8, %c0_9] : memref<1x128x128xf32, #tpu.memory_space<vmem>>, vector<1x128x128xf32>
    %11 = vector.shape_cast %10 : vector<1x128x128xf32> to vector<128x128xf32>
    %cst_10 = arith.constant dense<0.000000e+00> : vector<32x128xf32>
    %12 = tpu.matmul %9, %11, %cst_10 {dimension_numbers = #tpu.dot_dimension_numbers<[1], [0], [0], [1], [0, 0, 1, 1], [], []>} : vector<32x128xf32>, vector<128x128xf32>, vector<32x128xf32> -> vector<32x128xf32>
    %c0_11 = arith.constant 0 : index
    %c0_12 = arith.constant 0 : index
    %c0_13 = arith.constant 0 : index
    %13 = vector.load %arg5[%c0_11, %c0_12, %c0_13] : memref<1x1x128xf32, #tpu.memory_space<vmem>>, vector<1x1x128xf32>
    %14 = vector.shape_cast %13 : vector<1x1x128xf32> to vector<1x128xf32>
    %15 = vector.broadcast %14 : vector<1x128xf32> to vector<32x128xf32>
    %16 = arith.addf %12, %15 : vector<32x128xf32>
    %cst_14 = arith.constant 0.000000e+00 : f32
    %17 = vector.broadcast %cst_14 : f32 to vector<32x128xf32>
    %18 = arith.maximumf %16, %17 : vector<32x128xf32>
    %c0_15 = arith.constant 0 : index
    %c0_16 = arith.constant 0 : index
    %c0_17 = arith.constant 0 : index
    %19 = vector.load %arg6[%c0_15, %c0_16, %c0_17] : memref<1x128x128xf32, #tpu.memory_space<vmem>>, vector<1x128x128xf32>
    %20 = vector.shape_cast %19 : vector<1x128x128xf32> to vector<128x128xf32>
    %cst_18 = arith.constant dense<0.000000e+00> : vector<32x128xf32>
    %21 = tpu.matmul %18, %20, %cst_18 {dimension_numbers = #tpu.dot_dimension_numbers<[1], [0], [0], [1], [0, 0, 1, 1], [], []>} : vector<32x128xf32>, vector<128x128xf32>, vector<32x128xf32> -> vector<32x128xf32>
    %c0_19 = arith.constant 0 : index
    %c0_20 = arith.constant 0 : index
    %c0_21 = arith.constant 0 : index
    %22 = vector.load %arg7[%c0_19, %c0_20, %c0_21] : memref<1x1x128xf32, #tpu.memory_space<vmem>>, vector<1x1x128xf32>
    %23 = vector.shape_cast %22 : vector<1x1x128xf32> to vector<1x128xf32>
    %24 = vector.broadcast %23 : vector<1x128xf32> to vector<32x128xf32>
    %25 = arith.addf %21, %24 : vector<32x128xf32>
    %26 = tpu.iota {dimensions = array<i32: 0>} : vector<32x1xi32>
    %c30_i32 = arith.constant 30 : i32
    %27 = vector.broadcast %c30_i32 : i32 to vector<32x1xi32>
    %28 = arith.cmpi slt, %26, %27 : vector<32x1xi32>
    %29 = arith.extui %28 : vector<32x1xi1> to vector<32x1xi32>
    %30 = arith.sitofp %29 : vector<32x1xi32> to vector<32x1xf32>
    %31 = vector.broadcast %30 : vector<32x1xf32> to vector<32x128xf32>
    %32 = arith.mulf %25, %31 : vector<32x128xf32>
    %cst_22 = arith.constant dense<0.000000e+00> : vector<128xf32>
    %33 = vector.multi_reduction <add>, %32, %cst_22 [0] : vector<32x128xf32> to vector<128xf32>
    %34 = vector.shape_cast %33 : vector<128xf32> to vector<1x128xf32>
    %cst_23 = arith.constant 0.0333333351 : f32
    %35 = vector.broadcast %cst_23 : f32 to vector<1x128xf32>
    %36 = arith.mulf %34, %35 : vector<1x128xf32>
    %37 = vector.broadcast %36 : vector<1x128xf32> to vector<32x128xf32>
    %38 = arith.subf %25, %37 : vector<32x128xf32>
    %39 = arith.mulf %38, %38 : vector<32x128xf32>
    %40 = vector.broadcast %30 : vector<32x1xf32> to vector<32x128xf32>
    %41 = arith.mulf %39, %40 : vector<32x128xf32>
    %cst_24 = arith.constant dense<0.000000e+00> : vector<128xf32>
    %42 = vector.multi_reduction <add>, %41, %cst_24 [0] : vector<32x128xf32> to vector<128xf32>
    %43 = vector.shape_cast %42 : vector<128xf32> to vector<1x128xf32>
    %cst_25 = arith.constant 0.0333333351 : f32
    %44 = vector.broadcast %cst_25 : f32 to vector<1x128xf32>
    %45 = arith.mulf %43, %44 : vector<1x128xf32>
    %cst_26 = arith.constant 9.99999974E-6 : f32
    %46 = vector.broadcast %cst_26 : f32 to vector<1x128xf32>
    %47 = arith.addf %45, %46 : vector<1x128xf32>
    %48 = math.rsqrt %47 : vector<1x128xf32>
    %49 = vector.broadcast %48 : vector<1x128xf32> to vector<32x128xf32>
    %50 = arith.mulf %38, %49 : vector<32x128xf32>
    %c0_27 = arith.constant 0 : index
    %c0_28 = arith.constant 0 : index
    %c0_29 = arith.constant 0 : index
    %51 = vector.load %arg8[%c0_27, %c0_28, %c0_29] : memref<1x1x128xf32, #tpu.memory_space<vmem>>, vector<1x1x128xf32>
    %52 = vector.shape_cast %51 : vector<1x1x128xf32> to vector<1x128xf32>
    %53 = vector.broadcast %52 : vector<1x128xf32> to vector<32x128xf32>
    %54 = arith.mulf %50, %53 : vector<32x128xf32>
    %c0_30 = arith.constant 0 : index
    %c0_31 = arith.constant 0 : index
    %c0_32 = arith.constant 0 : index
    %55 = vector.load %arg9[%c0_30, %c0_31, %c0_32] : memref<1x1x128xf32, #tpu.memory_space<vmem>>, vector<1x1x128xf32>
    %56 = vector.shape_cast %55 : vector<1x1x128xf32> to vector<1x128xf32>
    %57 = vector.broadcast %56 : vector<1x128xf32> to vector<32x128xf32>
    %58 = arith.addf %54, %57 : vector<32x128xf32>
    %59 = vector.broadcast %30 : vector<32x1xf32> to vector<32x128xf32>
    %60 = arith.mulf %58, %59 : vector<32x128xf32>
    %c0_33 = arith.constant 0 : index
    %c0_34 = arith.constant 0 : index
    %61 = vector.load %arg10[%c0_33, %c0_34] : memref<32x128xf32, #tpu.memory_space<vmem>>, vector<32x128xf32>
    tpu.vector_store %arg10[%c0_33, %c0_34], %60 {strides = array<i32>} : memref<32x128xf32, #tpu.memory_space<vmem>>, vector<32x128xf32>,
    %cst_35 = arith.constant 0.000000e+00 : f32
    %62 = vector.broadcast %cst_35 : f32 to vector<32x128xf32>
    %63 = arith.maximumf %60, %62 : vector<32x128xf32>
    %c0_36 = arith.constant 0 : index
    %c0_37 = arith.constant 0 : index
    %64 = vector.load %arg11[%c0_36, %c0_37] : memref<32x128xf32, #tpu.memory_space<vmem>>, vector<32x128xf32>
    tpu.vector_store %arg11[%c0_36, %c0_37], %63 {strides = array<i32>} : memref<32x128xf32, #tpu.memory_space<vmem>>, vector<32x128xf32>,
    return
  }
  func.func @transform_0(%arg0: i32) -> (i32, i32) {
    %c0_i32 = arith.constant 0 : i32
    %c0_i32_0 = arith.constant 0 : i32
    %c0_i32_1 = arith.constant 0 : i32
    return %c0_i32, %c0_i32_0 : i32, i32
  }
  func.func @transform_1(%arg0: i32) -> (i32, i32) {
    %c0_i32 = arith.constant 0 : i32
    %c0_i32_0 = arith.constant 0 : i32
    %c0_i32_1 = arith.constant 0 : i32
    return %c0_i32, %c0_i32_0 : i32, i32
  }
  func.func @transform_2(%arg0: i32) -> (i32, i32, i32) {
    %c0_i32 = arith.constant 0 : i32
    %c0_i32_0 = arith.constant 0 : i32
    %c0_i32_1 = arith.constant 0 : i32
    return %arg0, %c0_i32, %c0_i32_0 : i32, i32, i32
  }
  func.func @transform_3(%arg0: i32) -> (i32, i32, i32) {
    %c0_i32 = arith.constant 0 : i32
    %c0_i32_0 = arith.constant 0 : i32
    %c0_i32_1 = arith.constant 0 : i32
    return %arg0, %c0_i32, %c0_i32_0 : i32, i32, i32
  }
  func.func @transform_4(%arg0: i32) -> (i32, i32, i32) {
    %c0_i32 = arith.constant 0 : i32
    %c0_i32_0 = arith.constant 0 : i32
    %c0_i32_1 = arith.constant 0 : i32
    return %arg0, %c0_i32, %c0_i32_0 : i32, i32, i32
  }
  func.func @transform_5(%arg0: i32) -> (i32, i32, i32) {
    %c0_i32 = arith.constant 0 : i32
    %c0_i32_0 = arith.constant 0 : i32
    %c0_i32_1 = arith.constant 0 : i32
    return %arg0, %c0_i32, %c0_i32_0 : i32, i32, i32
  }
  func.func @transform_6(%arg0: i32) -> (i32, i32, i32) {
    %c0_i32 = arith.constant 0 : i32
    %c0_i32_0 = arith.constant 0 : i32
    %c0_i32_1 = arith.constant 0 : i32
    return %arg0, %c0_i32, %c0_i32_0 : i32, i32, i32
  }
  func.func @transform_7(%arg0: i32) -> (i32, i32, i32) {
    %c0_i32 = arith.constant 0 : i32
    %c0_i32_0 = arith.constant 0 : i32
    %c0_i32_1 = arith.constant 0 : i32
    return %arg0, %c0_i32, %c0_i32_0 : i32, i32, i32
  }
  func.func @transform_8(%arg0: i32) -> (i32, i32, i32) {
    %c0_i32 = arith.constant 0 : i32
    %c0_i32_0 = arith.constant 0 : i32
    %c0_i32_1 = arith.constant 0 : i32
    return %arg0, %c0_i32, %c0_i32_0 : i32, i32, i32
  }
  func.func @transform_9(%arg0: i32) -> (i32, i32) {
    %c0_i32 = arith.constant 0 : i32
    %c0_i32_0 = arith.constant 0 : i32
    %c0_i32_1 = arith.constant 0 : i32
    return %c0_i32, %c0_i32_0 : i32, i32
  }
}

</mosaic_0001>

<llo_original>
// kernel: tpu_custom_call.1
$region0: #{tpu_custom_call.1}
  #allocation0 [shape = 'u32[]', space=smem, size = 0x4, offset = 0x4, fixed_abs, tag = 'smem constant byte address 0x4 - core index']
  #allocation1 [shape = 'u32[144,128]{1,0:T(1,128)}', space=vmem, size = 0x12000, scoped, tag = 'internal scratch']
  #allocation2 [shape = 'f32[32,128]{1,0:T(8,128)}', space=vmem, size = 0x4000, scoped, tag = 'scratch operand']
  %s0 = inlined_call_operand.hbm [shape: f32[32,128], index: 0, kind: input, shape index: {}]
  %s1 = inlined_call_operand.hbm [shape: bf16[32,32], index: 1, kind: input, shape index: {}]
  %s2 = inlined_call_operand.hbm [shape: f32[3,32,128], index: 2, kind: input, shape index: {}]
  %s3 = inlined_call_operand.hbm [shape: f32[3,128,128], index: 3, kind: input, shape index: {}]
  %s4 = inlined_call_operand.vmem [shape: f32[3,1,128], index: 4, kind: input, shape index: {}]
  %s5 = inlined_call_operand.hbm [shape: f32[3,128,128], index: 5, kind: input, shape index: {}]
  %s6 = inlined_call_operand.vmem [shape: f32[3,1,128], index: 6, kind: input, shape index: {}]
  %s7 = inlined_call_operand.vmem [shape: f32[3,1,128], index: 7, kind: input, shape index: {}]
  %s8 = inlined_call_operand.vmem [shape: f32[3,1,128], index: 8, kind: input, shape index: {}]
  %s9 = inlined_call_operand.hbm [shape: f32[32,128], index: 9, kind: output, shape index: {}]
  %s10 = sld [smem:[#allocation0]]
  $region93: #{tpu_custom_call.1} parent=0
    _
  %s12 = ssub.s32 1, %s10
  %s13 = scalar_select 0, %s12, %s10
  $region1: #{tpu_custom_call.1} parent=0
    #allocation3 [shape = 'u8[16384]{0}', space=vmem, size = 0x4000, scoped, tag = 'input window, operand 0, single buffered']
    #allocation4 [shape = 's32[2]{0}', space=sflag, size = 0x8, scoped, tag = 'scoped memory for tpu_custom_call.1']
    #allocation5 [shape = 's32[2]{0}', space=sflag, size = 0x8, scoped, tag = 'scoped memory for tpu_custom_call.1']
    #allocation6 [shape = 'u8[8192]{0}', space=vmem, size = 0x2000, scoped, tag = 'input window, operand 1, single buffered']
    #allocation7 [shape = 's32[1]{0}', space=sflag, size = 0x4, scoped, tag = 'scoped memory for tpu_custom_call.1']
    #allocation8 [shape = 'u8[32768]{0}', space=vmem, size = 0x8000, scoped, tag = 'input window, operand 2']
    #allocation9 [shape = 'u8[131072]{0}', space=vmem, size = 0x20000, scoped, tag = 'input window, operand 3']
    #allocation10 [shape = 'u8[131072]{0}', space=vmem, size = 0x20000, scoped, tag = 'input window, operand 5']
    #allocation11 [shape = 'u8[16384]{0}', space=vmem, size = 0x4000, scoped, tag = 'output window, operand 0, single buffered']
    %14 = vsyncpa [#allocation4], 0
    %15 = vsyncpa [#allocation7], 0
    %16 = vsyncpa [#allocation5], 0
    loop: start=0, step=1, limit=5
    $region2: #{tpu_custom_call.1} parent=1 // loop_pre_header
      _
    $region3: #{tpu_custom_call.1} parent=1 // loop_header
      %s18 = sphi 0, %s22
      %p19 = scmp.ge.s32.totalorder %s18, 5
      %s26 = sphi 0, %s26
      %s28 = sphi 0, %s26
      %s29 = sphi 0, %s28
      %s43 = sphi 0, %s29
      %s47 = sphi 0, %s47
      %s49 = sphi 0, %s47
      %s50 = sphi 0, %s49
      %s64 = sphi 0, %s50
      %s70 = sphi 0, %s72
      %s73 = sphi 0, %s70
      %s74 = sphi 0, %s73
      %s90 = sphi 0, %s74
      %s96 = sphi 0, %s98
      %s99 = sphi 0, %s96
      %s100 = sphi 0, %s99
      %s116 = sphi 0, %s100
      %s122 = sphi 0, %s124
      %s125 = sphi 0, %s122
      %s126 = sphi 0, %s125
      %s142 = sphi 0, %s126
      %s148 = sphi 0, %s150
      %s151 = sphi 0, %s148
      %s152 = sphi 0, %s151
      %s168 = sphi 0, %s152
      %s174 = sphi 0, %s176
      %s177 = sphi 0, %s174
      %s178 = sphi 0, %s177
      %s194 = sphi 0, %s178
      %s200 = sphi 0, %s202
      %s203 = sphi 0, %s200
      %s204 = sphi 0, %s203
      %s220 = sphi 0, %s204
      %s226 = sphi 0, %s228
      %s229 = sphi 0, %s226
      %s230 = sphi 0, %s229
      %s246 = sphi 0, %s230
      %s250 = sphi 0, %s250
      %s252 = sphi 0, %s250
      %s253 = sphi 0, %s252
      %s267 = sphi 0, %s253
    $region4: #{tpu_custom_call.1} parent=1 // loop_header_branch
      %21 = sbr.rel (%p19) target = $region8
    $region5: #{tpu_custom_call.1} parent=1 // loop_body
      %s23 = ssub.s32 %s18, 1
      %s24 = ssub.s32 %s18, 2
      %s25 = sadd.s32 %s18, 1
      %s27 = sadd.s32 %s26, 1
      %p30 = scmp.eq.s32.totalorder %s18, 2
      %p31 = scmp.ne.s32.totalorder %s26, %s28
      %p32 = scmp.eq.s32.totalorder %s18, 0
      %p33 = por %p31, %p32
      %p34 = scmp.ne.s32.totalorder %s26, %s28
      %p35 = scmp.eq.s32.totalorder %s23, 2
      %p36 = por %p34, %p35
      %p37 = scmp.ne.s32.totalorder %s28, %s29
      %p38 = scmp.eq.s32.totalorder %s23, 0
      %p39 = por %p37, %p38
      %p40 = scmp.ne.s32.totalorder %s28, %s29
      %p41 = scmp.eq.s32.totalorder %s24, 2
      %p42 = por %p40, %p41
      %p44 = scmp.ne.s32.totalorder %s29, %s43
      %p45 = scmp.eq.s32.totalorder %s24, 0
      %p46 = por %p44, %p45
      %s48 = sadd.s32 %s47, 1
      %p51 = scmp.eq.s32.totalorder %s18, 2
      %p52 = scmp.ne.s32.totalorder %s47, %s49
      %p53 = scmp.eq.s32.totalorder %s18, 0
      %p54 = por %p52, %p53
      %p55 = scmp.ne.s32.totalorder %s47, %s49
      %p56 = scmp.eq.s32.totalorder %s23, 2
      %p57 = por %p55, %p56
      %p58 = scmp.ne.s32.totalorder %s49, %s50
      %p59 = scmp.eq.s32.totalorder %s23, 0
      %p60 = por %p58, %p59
      %p61 = scmp.ne.s32.totalorder %s49, %s50
      %p62 = scmp.eq.s32.totalorder %s24, 2
      %p63 = por %p61, %p62
      %p65 = scmp.ne.s32.totalorder %s50, %s64
      %p66 = scmp.eq.s32.totalorder %s24, 0
      %p67 = por %p65, %p66
      %s68 = ssub.s32 %s18, %s25
      %p69 = scmp.eq.s32.totalorder %s68, 0
      %s71 = sadd.s32 %s70, 1
      %s72 = scalar_select %p69, %s70, %s71
      %p75 = pneg %p69
      %p76 = scmp.eq.s32.totalorder %s18, 2
      %p77 = por %p75, %p76
      %p78 = scmp.ne.s32.totalorder %s70, %s73
      %p79 = scmp.eq.s32.totalorder %s18, 0
      %p80 = por %p78, %p79
      %p81 = scmp.ne.s32.totalorder %s70, %s73
      %p82 = scmp.eq.s32.totalorder %s23, 2
      %p83 = por %p81, %p82
      %p84 = scmp.ne.s32.totalorder %s73, %s74
      %p85 = scmp.eq.s32.totalorder %s23, 0
      %p86 = por %p84, %p85
      %p87 = scmp.ne.s32.totalorder %s73, %s74
      %p88 = scmp.eq.s32.totalorder %s24, 2
      %p89 = por %p87, %p88
      %p91 = scmp.ne.s32.totalorder %s74, %s90
      %p92 = scmp.eq.s32.totalorder %s24, 0
      %p93 = por %p91, %p92
      %s94 = ssub.s32 %s18, %s25
      %p95 = scmp.eq.s32.totalorder %s94, 0
      %s97 = sadd.s32 %s96, 1
      %s98 = scalar_select %p95, %s96, %s97
      %p101 = pneg %p95
      %p102 = scmp.eq.s32.totalorder %s18, 2
      %p103 = por %p101, %p102
      %p104 = scmp.ne.s32.totalorder %s96, %s99
      %p105 = scmp.eq.s32.totalorder %s18, 0
      %p106 = por %p104, %p105
      %p107 = scmp.ne.s32.totalorder %s96, %s99
      %p108 = scmp.eq.s32.totalorder %s23, 2
      %p109 = por %p107, %p108
      %p110 = scmp.ne.s32.totalorder %s99, %s100
      %p111 = scmp.eq.s32.totalorder %s23, 0
      %p112 = por %p110, %p111
      %p113 = scmp.ne.s32.totalorder %s99, %s100
      %p114 = scmp.eq.s32.totalorder %s24, 2
      %p115 = por %p113, %p114
      %p117 = scmp.ne.s32.totalorder %s100, %s116
      %p118 = scmp.eq.s32.totalorder %s24, 0
      %p119 = por %p117, %p118
      %s120 = ssub.s32 %s18, %s25
      %p121 = scmp.eq.s32.totalorder %s120, 0
      %s123 = sadd.s32 %s122, 1
      %s124 = scalar_select %p121, %s122, %s123
      %p127 = pneg %p121
      %p128 = scmp.eq.s32.totalorder %s18, 2
      %p129 = por %p127, %p128
      %p130 = scmp.ne.s32.totalorder %s122, %s125
      %p131 = scmp.eq.s32.totalorder %s18, 0
      %p132 = por %p130, %p131
      %p133 = scmp.ne.s32.totalorder %s122, %s125
      %p134 = scmp.eq.s32.totalorder %s23, 2
      %p135 = por %p133, %p134
      %p136 = scmp.ne.s32.totalorder %s125, %s126
      %p137 = scmp.eq.s32.totalorder %s23, 0
      %p138 = por %p136, %p137
      %p139 = scmp.ne.s32.totalorder %s125, %s126
      %p140 = scmp.eq.s32.totalorder %s24, 2
      %p141 = por %p139, %p140
      %p143 = scmp.ne.s32.totalorder %s126, %s142
      %p144 = scmp.eq.s32.totalorder %s24, 0
      %p145 = por %p143, %p144
      %s146 = ssub.s32 %s18, %s25
      %p147 = scmp.eq.s32.totalorder %s146, 0
      %s149 = sadd.s32 %s148, 1
      %s150 = scalar_select %p147, %s148, %s149
      %p153 = pneg %p147
      %p154 = scmp.eq.s32.totalorder %s18, 2
      %p155 = por %p153, %p154
      %p156 = scmp.ne.s32.totalorder %s148, %s151
      %p157 = scmp.eq.s32.totalorder %s18, 0
      %p158 = por %p156, %p157
      %p159 = scmp.ne.s32.totalorder %s148, %s151
      %p160 = scmp.eq.s32.totalorder %s23, 2
      %p161 = por %p159, %p160
      %p162 = scmp.ne.s32.totalorder %s151, %s152
      %p163 = scmp.eq.s32.totalorder %s23, 0
      %p164 = por %p162, %p163
      %p165 = scmp.ne.s32.totalorder %s151, %s152
      %p166 = scmp.eq.s32.totalorder %s24, 2
      %p167 = por %p165, %p166
      %p169 = scmp.ne.s32.totalorder %s152, %s168
      %p170 = scmp.eq.s32.totalorder %s24, 0
      %p171 = por %p169, %p170
      %s172 = ssub.s32 %s18, %s25
      %p173 = scmp.eq.s32.totalorder %s172, 0
      %s175 = sadd.s32 %s174, 1
      %s176 = scalar_select %p173, %s174, %s175
      %p179 = pneg %p173
      %p180 = scmp.eq.s32.totalorder %s18, 2
      %p181 = por %p179, %p180
      %p182 = scmp.ne.s32.totalorder %s174, %s177
      %p183 = scmp.eq.s32.totalorder %s18, 0
      %p184 = por %p182, %p183
      %p185 = scmp.ne.s32.totalorder %s174, %s177
      %p186 = scmp.eq.s32.totalorder %s23, 2
      %p187 = por %p185, %p186
      %p188 = scmp.ne.s32.totalorder %s177, %s178
      %p189 = scmp.eq.s32.totalorder %s23, 0
      %p190 = por %p188, %p189
      %p191 = scmp.ne.s32.totalorder %s177, %s178
      %p192 = scmp.eq.s32.totalorder %s24, 2
      %p193 = por %p191, %p192
      %p195 = scmp.ne.s32.totalorder %s178, %s194
      %p196 = scmp.eq.s32.totalorder %s24, 0
      %p197 = por %p195, %p196
      %s198 = ssub.s32 %s18, %s25
      %p199 = scmp.eq.s32.totalorder %s198, 0
      %s201 = sadd.s32 %s200, 1
      %s202 = scalar_select %p199, %s200, %s201
      %p205 = pneg %p199
      %p206 = scmp.eq.s32.totalorder %s18, 2
      %p207 = por %p205, %p206
      %p208 = scmp.ne.s32.totalorder %s200, %s203
      %p209 = scmp.eq.s32.totalorder %s18, 0
      %p210 = por %p208, %p209
      %p211 = scmp.ne.s32.totalorder %s200, %s203
      %p212 = scmp.eq.s32.totalorder %s23, 2
      %p213 = por %p211, %p212
      %p214 = scmp.ne.s32.totalorder %s203, %s204
      %p215 = scmp.eq.s32.totalorder %s23, 0
      %p216 = por %p214, %p215
      %p217 = scmp.ne.s32.totalorder %s203, %s204
      %p218 = scmp.eq.s32.totalorder %s24, 2
      %p219 = por %p217, %p218
      %p221 = scmp.ne.s32.totalorder %s204, %s220
      %p222 = scmp.eq.s32.totalorder %s24, 0
      %p223 = por %p221, %p222
      %s224 = ssub.s32 %s18, %s25
      %p225 = scmp.eq.s32.totalorder %s224, 0
      %s227 = sadd.s32 %s226, 1
      %s228 = scalar_select %p225, %s226, %s227
      %p231 = pneg %p225
      %p232 = scmp.eq.s32.totalorder %s18, 2
      %p233 = por %p231, %p232
      %p234 = scmp.ne.s32.totalorder %s226, %s229
      %p235 = scmp.eq.s32.totalorder %s18, 0
      %p236 = por %p234, %p235
      %p237 = scmp.ne.s32.totalorder %s226, %s229
      %p238 = scmp.eq.s32.totalorder %s23, 2
      %p239 = por %p237, %p238
      %p240 = scmp.ne.s32.totalorder %s229, %s230
      %p241 = scmp.eq.s32.totalorder %s23, 0
      %p242 = por %p240, %p241
      %p243 = scmp.ne.s32.totalorder %s229, %s230
      %p244 = scmp.eq.s32.totalorder %s24, 2
      %p245 = por %p243, %p244
      %p247 = scmp.ne.s32.totalorder %s230, %s246
      %p248 = scmp.eq.s32.totalorder %s24, 0
      %p249 = por %p247, %p248
      %s251 = sadd.s32 %s250, 1
      %p254 = scmp.eq.s32.totalorder %s18, 2
      %p255 = scmp.ne.s32.totalorder %s250, %s252
      %p256 = scmp.eq.s32.totalorder %s18, 0
      %p257 = por %p255, %p256
      %p258 = scmp.ne.s32.totalorder %s250, %s252
      %p259 = scmp.eq.s32.totalorder %s23, 2
      %p260 = por %p258, %p259
      %p261 = scmp.ne.s32.totalorder %s252, %s253
      %p262 = scmp.eq.s32.totalorder %s23, 0
      %p263 = por %p261, %p262
      %p264 = scmp.ne.s32.totalorder %s252, %s253
      %p265 = scmp.eq.s32.totalorder %s24, 2
      %p266 = por %p264, %p265
      %p268 = scmp.ne.s32.totalorder %s253, %s267
      %p269 = scmp.eq.s32.totalorder %s24, 0
      %p270 = por %p268, %p269
      %p271 = scmp.le.s32.totalorder 1, %s18
      %p272 = scmp.lt.s32.totalorder %s18, 4
      %p273 = pnand %p271, %p272
      %p274 = pneg %p273
      // Predicated region
      $region9: #{tpu_custom_call.1} parent=5 // pred_check
        _
      $region10: #{tpu_custom_call.1} parent=5 // pred_check_branch
        %276 = sbr.rel (%p273) target = $region12
      $region11: #{tpu_custom_call.1} parent=5 // pred_region
        %s277 = ssub.s32 %s18, 1
        // Predicated region
        $region13: #{tpu_custom_call.1} parent=11 // pred_check
          %p278 = pneg %p39
        $region14: #{tpu_custom_call.1} parent=11 // pred_check_branch
          %280 = sbr.rel (%p278) target = $region16
        $region15: #{tpu_custom_call.1} parent=11 // pred_region
          %s282 = ssub.s32 512, 512
          %283 = vsyncadd [#allocation4], %s282
          %s284 = sshll.u32 [#allocation3], 4
          %s285 = int_to_ptr.vmem [resolvable:$true] %s284
          %290 = dma.hbm_to_vmem [thread:$0]  %s0, 512, %s285, [#allocation4], 128, 128, 8
        $region16: #{tpu_custom_call.1} parent=11 // pred_fallthru
          _
        // Predicated region
        $region17: #{tpu_custom_call.1} parent=11 // pred_check
          %p291 = pneg %p60
        $region18: #{tpu_custom_call.1} parent=11 // pred_check_branch
          %293 = sbr.rel (%p291) target = $region20
        $region19: #{tpu_custom_call.1} parent=11 // pred_region
          %s295 = ssub.s32 256, 256
          %296 = vsyncadd [#allocation7], %s295
          %s297 = sshll.u32 [#allocation6], 4
          %s298 = int_to_ptr.vmem [resolvable:$true] %s297
          %303 = dma.hbm_to_vmem [thread:$0]  %s1, 256, %s298, [#allocation7], 64, 64, 4
        $region20: #{tpu_custom_call.1} parent=11 // pred_fallthru
          _
      $region12: #{tpu_custom_call.1} parent=5 // pred_fallthru
        _
      %p304 = scmp.lt.s32.totalorder %s18, 3
      // Predicated region
      $region21: #{tpu_custom_call.1} parent=5 // pred_check
        %p305 = pneg %p304
      $region22: #{tpu_custom_call.1} parent=5 // pred_check_branch
        %307 = sbr.rel (%p305) target = $region24
      $region23: #{tpu_custom_call.1} parent=5 // pred_region
        // Predicated region
        $region25: #{tpu_custom_call.1} parent=23 // pred_check
          %p308 = pneg %p80
        $region26: #{tpu_custom_call.1} parent=23 // pred_check_branch
          %310 = sbr.rel (%p308) target = $region28
        $region27: #{tpu_custom_call.1} parent=23 // pred_region
          %s311 = sand.u32 %s18, 1
          %s312 = scalar_lea.sflag [#allocation4], %s311
          %s313 = sand.u32 %s70, 1
          %s314 = smul.addr %s313, 32
          %s315 = scalar_lea.vmem [#allocation8], %s314
          %s317 = ssub.s32 512, 512
          %318 = vsyncadd %s312, %s317
          %s319 = smul.addr %s18, 4
          %s320 = smul.addr %s319, 128
          %s321 = scalar_lea.hbm %s2, %s320
          %s322 = sshll.u32 %s315, 4
          %s323 = int_to_ptr.vmem [resolvable:$true] %s322
          %328 = dma.hbm_to_vmem [thread:$0]  %s321, 512, %s323, %s312, 128, 128, 8
        $region28: #{tpu_custom_call.1} parent=23 // pred_fallthru
          _
        // Predicated region
        $region29: #{tpu_custom_call.1} parent=23 // pred_check
          %p329 = pneg %p106
        $region30: #{tpu_custom_call.1} parent=23 // pred_check_branch
          %331 = sbr.rel (%p329) target = $region32
        $region31: #{tpu_custom_call.1} parent=23 // pred_region
          %s332 = sand.u32 %s18, 1
          %s333 = scalar_lea.sflag [#allocation4], %s332
          %s334 = sand.u32 %s96, 1
          %s335 = smul.addr %s334, 128
          %s336 = scalar_lea.vmem [#allocation9], %s335
          %s338 = ssub.s32 2048, 2048
          %339 = vsyncadd %s333, %s338
          %s340 = smul.addr %s18, 16
          %s341 = smul.addr %s340, 128
          %s342 = scalar_lea.hbm %s3, %s341
          %s343 = sshll.u32 %s336, 4
          %s344 = int_to_ptr.vmem [resolvable:$true] %s343
          %349 = dma.hbm_to_vmem [thread:$0]  %s342, 2048, %s344, %s333, 128, 128, 8
        $region32: #{tpu_custom_call.1} parent=23 // pred_fallthru
          _
        // Predicated region
        $region33: #{tpu_custom_call.1} parent=23 // pred_check
          %p350 = pneg %p132
        $region34: #{tpu_custom_call.1} parent=23 // pred_check_branch
          %352 = sbr.rel (%p350) target = $region36
        $region35: #{tpu_custom_call.1} parent=23 // pred_region
          %p353 = scmp.lt.s32.totalorder %s18, 2
          %s354 = scalar_select %p353, %s18, 2
          %s355 = scalar_lea.vmem %s4, %s354
        $region36: #{tpu_custom_call.1} parent=23 // pred_fallthru
          _
        // Predicated region
        $region37: #{tpu_custom_call.1} parent=23 // pred_check
          %p356 = pneg %p158
        $region38: #{tpu_custom_call.1} parent=23 // pred_check_branch
          %358 = sbr.rel (%p356) target = $region40
        $region39: #{tpu_custom_call.1} parent=23 // pred_region
          %s359 = sand.u32 %s18, 1
          %s360 = scalar_lea.sflag [#allocation4], %s359
          %s361 = sand.u32 %s148, 1
          %s362 = smul.addr %s361, 128
          %s363 = scalar_lea.vmem [#allocation10], %s362
          %s365 = ssub.s32 2048, 2048
          %366 = vsyncadd %s360, %s365
          %s367 = smul.addr %s18, 16
          %s368 = smul.addr %s367, 128
          %s369 = scalar_lea.hbm %s5, %s368
          %s370 = sshll.u32 %s363, 4
          %s371 = int_to_ptr.vmem [resolvable:$true] %s370
          %376 = dma.hbm_to_vmem [thread:$0]  %s369, 2048, %s371, %s360, 128, 128, 8
        $region40: #{tpu_custom_call.1} parent=23 // pred_fallthru
          _
        // Predicated region
        $region41: #{tpu_custom_call.1} parent=23 // pred_check
          %p377 = pneg %p184
        $region42: #{tpu_custom_call.1} parent=23 // pred_check_branch
          %379 = sbr.rel (%p377) target = $region44
        $region43: #{tpu_custom_call.1} parent=23 // pred_region
          %p380 = scmp.lt.s32.totalorder %s18, 2
          %s381 = scalar_select %p380, %s18, 2
          %s382 = scalar_lea.vmem %s6, %s381
        $region44: #{tpu_custom_call.1} parent=23 // pred_fallthru
          _
        // Predicated region
        $region45: #{tpu_custom_call.1} parent=23 // pred_check
          %p383 = pneg %p210
        $region46: #{tpu_custom_call.1} parent=23 // pred_check_branch
          %385 = sbr.rel (%p383) target = $region48
        $region47: #{tpu_custom_call.1} parent=23 // pred_region
          %p386 = scmp.lt.s32.totalorder %s18, 2
          %s387 = scalar_select %p386, %s18, 2
          %s388 = scalar_lea.vmem %s7, %s387
        $region48: #{tpu_custom_call.1} parent=23 // pred_fallthru
          _
        // Predicated region
        $region49: #{tpu_custom_call.1} parent=23 // pred_check
          %p389 = pneg %p236
        $region50: #{tpu_custom_call.1} parent=23 // pred_check_branch
          %391 = sbr.rel (%p389) target = $region52
        $region51: #{tpu_custom_call.1} parent=23 // pred_region
          %p392 = scmp.lt.s32.totalorder %s18, 2
          %s393 = scalar_select %p392, %s18, 2
          %s394 = scalar_lea.vmem %s8, %s393
        $region52: #{tpu_custom_call.1} parent=23 // pred_fallthru
          _
      $region24: #{tpu_custom_call.1} parent=5 // pred_fallthru
        _
      %p395 = scmp.le.s32.totalorder 1, %s18
      %p396 = scmp.lt.s32.totalorder %s18, 4
      %p397 = pnand %p395, %p396
      %p398 = pneg %p397
      // Predicated region
      $region53: #{tpu_custom_call.1} parent=5 // pred_check
        _
      $region54: #{tpu_custom_call.1} parent=5 // pred_check_branch
        %400 = sbr.rel (%p397) target = $region56
      $region55: #{tpu_custom_call.1} parent=5 // pred_region
        %s401 = ssub.s32 %s18, 1
        // Predicated region
        $region57: #{tpu_custom_call.1} parent=55 // pred_check
          %p402 = pneg %p39
        $region58: #{tpu_custom_call.1} parent=55 // pred_check_branch
          %404 = sbr.rel (%p402) target = $region60
        $region59: #{tpu_custom_call.1} parent=55 // pred_region
          %405 = dma.done [#allocation4], 512
        $region60: #{tpu_custom_call.1} parent=55 // pred_fallthru
          _
        // Predicated region
        $region61: #{tpu_custom_call.1} parent=55 // pred_check
          %p406 = pneg %p60
        $region62: #{tpu_custom_call.1} parent=55 // pred_check_branch
          %408 = sbr.rel (%p406) target = $region64
        $region63: #{tpu_custom_call.1} parent=55 // pred_region
          %409 = dma.done [#allocation7], 256
        $region64: #{tpu_custom_call.1} parent=55 // pred_fallthru
          _
        %s410 = sand.u32 %s23, 1
        %s411 = scalar_lea.sflag [#allocation4], %s410
        %s412 = sand.u32 %s73, 1
        %s413 = smul.addr %s412, 32
        %s414 = scalar_lea.vmem [#allocation8], %s413
        // Predicated region
        $region65: #{tpu_custom_call.1} parent=55 // pred_check
          %p415 = pneg %p86
        $region66: #{tpu_custom_call.1} parent=55 // pred_check_branch
          %417 = sbr.rel (%p415) target = $region68
        $region67: #{tpu_custom_call.1} parent=55 // pred_region
          %418 = dma.done %s411, 512
        $region68: #{tpu_custom_call.1} parent=55 // pred_fallthru
          _
        %s419 = sand.u32 %s23, 1
        %s420 = scalar_lea.sflag [#allocation4], %s419
        %s421 = sand.u32 %s99, 1
        %s422 = smul.addr %s421, 128
        %s423 = scalar_lea.vmem [#allocation9], %s422
        // Predicated region
        $region69: #{tpu_custom_call.1} parent=55 // pred_check
          %p424 = pneg %p112
        $region70: #{tpu_custom_call.1} parent=55 // pred_check_branch
          %426 = sbr.rel (%p424) target = $region72
        $region71: #{tpu_custom_call.1} parent=55 // pred_region
          %427 = dma.done %s420, 2048
        $region72: #{tpu_custom_call.1} parent=55 // pred_fallthru
          _
        %s428 = sand.u32 %s23, 1
        %s429 = scalar_lea.sflag [#allocation4], %s428
        %s430 = sand.u32 %s151, 1
        %s431 = smul.addr %s430, 128
        %s432 = scalar_lea.vmem [#allocation10], %s431
        // Predicated region
        $region73: #{tpu_custom_call.1} parent=55 // pred_check
          %p433 = pneg %p164
        $region74: #{tpu_custom_call.1} parent=55 // pred_check_branch
          %435 = sbr.rel (%p433) target = $region76
        $region75: #{tpu_custom_call.1} parent=55 // pred_region
          %436 = dma.done %s429, 2048
        $region76: #{tpu_custom_call.1} parent=55 // pred_fallthru
          _
        %p437 = pneg %p39
        %p438 = pneg %p36
        %p439 = pneg %p60
        %p440 = pneg %p57
        %s441 = sand.u32 %s23, 1
        %s442 = scalar_lea.sflag [#allocation4], %s441
        %s443 = sand.u32 %s73, 1
        %s444 = smul.addr %s443, 32
        %s445 = scalar_lea.vmem [#allocation8], %s444
        %p446 = pneg %p86
        %p447 = pneg %p83
        %s448 = sand.u32 %s23, 1
        %s449 = scalar_lea.sflag [#allocation4], %s448
        %s450 = sand.u32 %s99, 1
        %s451 = smul.addr %s450, 128
        %s452 = scalar_lea.vmem [#allocation9], %s451
        %p453 = pneg %p112
        %p454 = pneg %p109
        %p455 = scmp.lt.s32.totalorder %s23, 2
        %s456 = scalar_select %p455, %s23, 2
        %s457 = scalar_lea.vmem %s4, %s456
        %p458 = pneg %p138
        %p459 = pneg %p135
        %s460 = sand.u32 %s23, 1
        %s461 = scalar_lea.sflag [#allocation4], %s460
        %s462 = sand.u32 %s151, 1
        %s463 = smul.addr %s462, 128
        %s464 = scalar_lea.vmem [#allocation10], %s463
        %p465 = pneg %p164
        %p466 = pneg %p161
        %p467 = scmp.lt.s32.totalorder %s23, 2
        %s468 = scalar_select %p467, %s23, 2
        %s469 = scalar_lea.vmem %s6, %s468
        %p470 = pneg %p190
        %p471 = pneg %p187
        %p472 = scmp.lt.s32.totalorder %s23, 2
        %s473 = scalar_select %p472, %s23, 2
        %s474 = scalar_lea.vmem %s7, %s473
        %p475 = pneg %p216
        %p476 = pneg %p213
        %p477 = scmp.lt.s32.totalorder %s23, 2
        %s478 = scalar_select %p477, %s23, 2
        %s479 = scalar_lea.vmem %s8, %s478
        %p480 = pneg %p242
        %p481 = pneg %p239
        %p482 = pneg %p263
        %p483 = pneg %p260
        %p484 = scmp.lt.s32.totalorder %s23, 2
        %s485 = scalar_select %p484, %s23, 2
        %s486 = scalar_lea.vmem %s4, %s485
        %p487 = scmp.lt.s32.totalorder %s23, 2
        %s488 = scalar_select %p487, %s23, 2
        %s489 = scalar_lea.vmem %s6, %s488
        %p490 = scmp.lt.s32.totalorder %s23, 2
        %s491 = scalar_select %p490, %s23, 2
        %s492 = scalar_lea.vmem %s7, %s491
        %p493 = scmp.lt.s32.totalorder %s23, 2
        %s494 = scalar_select %p493, %s23, 2
        %s495 = scalar_lea.vmem %s8, %s494
        %p496 = scmp.eq.s32.totalorder %s23, 0
        // Predicated region
        $region77: #{tpu_custom_call.1} parent=55 // pred_check
          %p497 = pneg %p496
        $region78: #{tpu_custom_call.1} parent=55 // pred_check_branch
          %499 = sbr.rel (%p497) target = $region80
        $region79: #{tpu_custom_call.1} parent=55 // pred_region
          %v500 = vld [vmem:[#allocation3] sm:$0xff]
          %v501 = vld [vmem:[#allocation3 + $0x8] sm:$0xff]
          %v502 = vld [vmem:[#allocation3 + $0x10] sm:$0xff]
          %v503 = vld [vmem:[#allocation3 + $0x18] sm:$0xff]
          %504 = vst [vmem:[#allocation2] sm:$0xff] %v500
          %505 = vst [vmem:[#allocation2 + $0x8] sm:$0xff] %v501
          %506 = vst [vmem:[#allocation2 + $0x10] sm:$0xff] %v502
          %507 = vst [vmem:[#allocation2 + $0x18] sm:$0xff] %v503
        $region80: #{tpu_custom_call.1} parent=55 // pred_fallthru
          _
        %v508 = vld [vmem:[#allocation2] sm:$0xff]
        %v509 = vld [vmem:[#allocation2 + $0x8] sm:$0xff]
        %v510 = vld [vmem:[#allocation2 + $0x10] sm:$0xff]
        %v511 = vld [vmem:[#allocation2 + $0x18] sm:$0xff]
        %v512 = vld [vmem:[#allocation6] sm:$0xf]
        %v513 = vld [vmem:[#allocation6 + $0x4] sm:$0xf]
        %v514 = vld [vmem:[#allocation6 + $0x8] sm:$0xf]
        %v515 = vld [vmem:[#allocation6 + $0xc] sm:$0xf]
        %v516 = vunpack.c.l.bf16 %v512
        %v517 = vunpack.c.l.bf16 %v513
        %v518 = vunpack.c.l.bf16 %v514
        %v519 = vunpack.c.l.bf16 %v515
        %v520 = vld [vmem:[%s414] sm:$0xff]
        %v521 = vld [vmem:[%s414 + $0x8] sm:$0xff]
        %v522 = vld [vmem:[%s414 + $0x10] sm:$0xff]
        %v523 = vld [vmem:[%s414 + $0x18] sm:$0xff]
        %vm524 = vcmask 261120
        %v526 = vsel %vm524, %v516, 0
        %v529 = vsel %vm524, %v517, 0
        %v532 = vsel %vm524, %v518, 0
        %v535 = vsel %vm524, %v519, 0
        %537 = vmatprep.subr.mxu0 0.0
        %538 = vmatpush1.msra.mxu0 %v508
        %539 = vmatprep.subr.mxu0 0.0
        %540 = vmatpush1.msra.mxu0 %v509
        %541 = vmatprep.subr.mxu0 0.0
        %542 = vmatpush1.msra.mxu0 %v510
        %543 = vmatprep.subr.mxu0 0.0
        %544 = vmatpush1.msra.mxu0 %v511
        %545 = vmatprep.subr.mxu0 0.0
        %546 = vmatpush1.msra.mxu0 0.0
        %547 = vmatprep.subr.mxu0 0.0
        %548 = vmatpush1.msra.mxu0 0.0
        %549 = vmatprep.subr.mxu0 0.0
        %550 = vmatpush1.msra.mxu0 0.0
        %551 = vmatprep.subr.mxu0 0.0
        %552 = vmatpush1.msra.mxu0 0.0
        %553 = vmatprep.subr.mxu0 0.0
        %554 = vmatpush1.msra.mxu0 0.0
        %555 = vmatprep.subr.mxu0 0.0
        %556 = vmatpush1.msra.mxu0 0.0
        %557 = vmatprep.subr.mxu0 0.0
        %558 = vmatpush1.msra.mxu0 0.0
        %559 = vmatprep.subr.mxu0 0.0
        %560 = vmatpush1.msra.mxu0 0.0
        %561 = vmatprep.subr.mxu0 0.0
        %562 = vmatpush1.msra.mxu0 0.0
        %563 = vmatprep.subr.mxu0 0.0
        %564 = vmatpush1.msra.mxu0 0.0
        %565 = vmatprep.subr.mxu0 0.0
        %566 = vmatpush1.msra.mxu0 0.0
        %567 = vmatprep.subr.mxu0 0.0
        %568 = vmatpush1.msra.mxu0 0.0
        %569 = vmatprep.subr.mxu0 0.0
        %570 = vmatpush1.msra.mxu0 0.0
        %571 = vmatprep.subr.mxu0 0.0
        %572 = vmatpush1.msra.mxu0 0.0
        %573 = vmatprep.subr.mxu0 0.0
        %574 = vmatpush1.msra.mxu0 0.0
        %575 = vmatprep.subr.mxu0 0.0
        %576 = vmatpush1.msra.mxu0 0.0
        %577 = vmatprep.subr.mxu0 0.0
        %578 = vmatpush1.msra.mxu0 0.0
        %579 = vmatprep.subr.mxu0 0.0
        %580 = vmatpush1.msra.mxu0 0.0
        %581 = vmatprep.subr.mxu0 0.0
        %582 = vmatpush1.msra.mxu0 0.0
        %583 = vmatprep.subr.mxu0 0.0
        %584 = vmatpush1.msra.mxu0 0.0
        %585 = vmatprep.subr.mxu0 0.0
        %586 = vmatpush1.msra.mxu0 0.0
        %587 = vmatprep.subr.mxu0 0.0
        %588 = vmatpush1.msra.mxu0 0.0
        %589 = vmatprep.subr.mxu0 0.0
        %590 = vmatpush1.msra.mxu0 0.0
        %591 = vmatprep.subr.mxu0 0.0
        %592 = vmatpush1.msra.mxu0 0.0
        %593 = vmatprep.subr.mxu0 0.0
        %594 = vmatpush1.msra.mxu0 0.0
        %595 = vmatprep.subr.mxu0 0.0
        %596 = vmatpush1.msra.mxu0 0.0
        %597 = vmatprep.subr.mxu0 0.0
        %598 = vmatpush1.msra.mxu0 0.0
        %599 = vmatprep.subr.mxu0 0.0
        %600 = vmatpush1.msra.mxu0 0.0
        %601 = vmatprep.mubr.f32.mxu0 0.0
        %602 = vmatmul.mubr.f32.gmra.mrb[0].mxu0 %v526
        %v603 = vpop.f32.mrb[0].mxu0
        %v604 = vadd.f32 %v520, %v603
        %v605 = vpop.f32.mrb[0].mxu0
        %606 = vmatprep.mubr.f32.mxu0 0.0
        %607 = vmatmul.mubr.f32.gmra.mrb[0].mxu0 %v529
        %v608 = vpop.f32.mrb[0].mxu0
        %v609 = vadd.f32 %v521, %v608
        %v610 = vpop.f32.mrb[0].mxu0
        %611 = vmatprep.mubr.f32.mxu0 0.0
        %612 = vmatmul.mubr.f32.gmra.mrb[0].mxu0 %v532
        %v613 = vpop.f32.mrb[0].mxu0
        %v614 = vadd.f32 %v522, %v613
        %v615 = vpop.f32.mrb[0].mxu0
        %616 = vmatprep.mubr.f32.mxu0 0.0
        %617 = vmatmul.mubr.f32.gmra.mrb[0].mxu0 %v535
        %v618 = vpop.f32.mrb[0].mxu0
        %v619 = vadd.f32 %v523, %v618
        %v620 = vpop.f32.mrb[0].mxu0
        %621 = vdwg.mxu0
        %v622 = vld [vmem:[%s423] sm:$0xff]
        %v623 = vld [vmem:[%s423 + $0x8] sm:$0xff]
        %v624 = vld [vmem:[%s423 + $0x10] sm:$0xff]
        %v625 = vld [vmem:[%s423 + $0x18] sm:$0xff]
        %v626 = vld [vmem:[%s423 + $0x20] sm:$0xff]
        %v627 = vld [vmem:[%s423 + $0x28] sm:$0xff]
        %v628 = vld [vmem:[%s423 + $0x30] sm:$0xff]
        %v629 = vld [vmem:[%s423 + $0x38] sm:$0xff]
        %v630 = vld [vmem:[%s423 + $0x40] sm:$0xff]
        %v631 = vld [vmem:[%s423 + $0x48] sm:$0xff]
        %v632 = vld [vmem:[%s423 + $0x50] sm:$0xff]
        %v633 = vld [vmem:[%s423 + $0x58] sm:$0xff]
        %v634 = vld [vmem:[%s423 + $0x60] sm:$0xff]
        %v635 = vld [vmem:[%s423 + $0x68] sm:$0xff]
        %v636 = vld [vmem:[%s423 + $0x70] sm:$0xff]
        %v637 = vld [vmem:[%s423 + $0x78] sm:$0xff]
        %v638 = vld [vmem:[%s486] sm:$0x1]
        %v640 = vlaneseq
        %v641 = vshrl.u32 %v640, 7
        %v642 = vsub.s32 0, %v641
        %v643 = vrot.slane %v638, %v642
        %645 = vmatprep.subr.mxu0 0.0
        %646 = vmatpush1.msra.mxu0 %v622
        %647 = vmatprep.subr.mxu0 0.0
        %648 = vmatpush1.msra.mxu0 %v623
        %649 = vmatprep.subr.mxu0 0.0
        %650 = vmatpush1.msra.mxu0 %v624
        %651 = vmatprep.subr.mxu0 0.0
        %652 = vmatpush1.msra.mxu0 %v625
        %653 = vmatprep.subr.mxu0 0.0
        %654 = vmatpush1.msra.mxu0 %v626
        %655 = vmatprep.subr.mxu0 0.0
        %656 = vmatpush1.msra.mxu0 %v627
        %657 = vmatprep.subr.mxu0 0.0
        %658 = vmatpush1.msra.mxu0 %v628
        %659 = vmatprep.subr.mxu0 0.0
        %660 = vmatpush1.msra.mxu0 %v629
        %661 = vmatprep.subr.mxu0 0.0
        %662 = vmatpush1.msra.mxu0 %v630
        %663 = vmatprep.subr.mxu0 0.0
        %664 = vmatpush1.msra.mxu0 %v631
        %665 = vmatprep.subr.mxu0 0.0
        %666 = vmatpush1.msra.mxu0 %v632
        %667 = vmatprep.subr.mxu0 0.0
        %668 = vmatpush1.msra.mxu0 %v633
        %669 = vmatprep.subr.mxu0 0.0
        %670 = vmatpush1.msra.mxu0 %v634
        %671 = vmatprep.subr.mxu0 0.0
        %672 = vmatpush1.msra.mxu0 %v635
        %673 = vmatprep.subr.mxu0 0.0
        %674 = vmatpush1.msra.mxu0 %v636
        %675 = vmatprep.subr.mxu0 0.0
        %676 = vmatpush1.msra.mxu0 %v637
        %677 = vmatprep.subr.mxu0 0.0
        %678 = vmatpush1.msra.mxu0 0.0
        %679 = vmatprep.subr.mxu0 0.0
        %680 = vmatpush1.msra.mxu0 0.0
        %681 = vmatprep.subr.mxu0 0.0
        %682 = vmatpush1.msra.mxu0 0.0
        %683 = vmatprep.subr.mxu0 0.0
        %684 = vmatpush1.msra.mxu0 0.0
        %685 = vmatprep.subr.mxu0 0.0
        %686 = vmatpush1.msra.mxu0 0.0
        %687 = vmatprep.subr.mxu0 0.0
        %688 = vmatpush1.msra.mxu0 0.0
        %689 = vmatprep.subr.mxu0 0.0
        %690 = vmatpush1.msra.mxu0 0.0
        %691 = vmatprep.subr.mxu0 0.0
        %692 = vmatpush1.msra.mxu0 0.0
        %693 = vmatprep.subr.mxu0 0.0
        %694 = vmatpush1.msra.mxu0 0.0
        %695 = vmatprep.subr.mxu0 0.0
        %696 = vmatpush1.msra.mxu0 0.0
        %697 = vmatprep.subr.mxu0 0.0
        %698 = vmatpush1.msra.mxu0 0.0
        %699 = vmatprep.subr.mxu0 0.0
        %700 = vmatpush1.msra.mxu0 0.0
        %701 = vmatprep.subr.mxu0 0.0
        %702 = vmatpush1.msra.mxu0 0.0
        %703 = vmatprep.subr.mxu0 0.0
        %704 = vmatpush1.msra.mxu0 0.0
        %705 = vmatprep.subr.mxu0 0.0
        %706 = vmatpush1.msra.mxu0 0.0
        %707 = vmatprep.subr.mxu0 0.0
        %708 = vmatpush1.msra.mxu0 0.0
        %709 = vmatprep.mubr.f32.mxu0 0.0
        %710 = vmatmul.mubr.f32.gmra.mrb[0].mxu0 %v604
        %v711 = vpop.f32.mrb[0].mxu0
        %v712 = vadd.f32 %v643, %v711
        %v713 = vpop.f32.mrb[0].mxu0
        %714 = vmatprep.mubr.f32.mxu0 0.0
        %715 = vmatmul.mubr.f32.gmra.mrb[0].mxu0 %v609
        %v716 = vpop.f32.mrb[0].mxu0
        %v717 = vadd.f32 %v643, %v716
        %v718 = vpop.f32.mrb[0].mxu0
        %719 = vmatprep.mubr.f32.mxu0 0.0
        %720 = vmatmul.mubr.f32.gmra.mrb[0].mxu0 %v614
        %v721 = vpop.f32.mrb[0].mxu0
        %v722 = vadd.f32 %v643, %v721
        %v723 = vpop.f32.mrb[0].mxu0
        %724 = vmatprep.mubr.f32.mxu0 0.0
        %725 = vmatmul.mubr.f32.gmra.mrb[0].mxu0 %v619
        %v726 = vpop.f32.mrb[0].mxu0
        %v727 = vadd.f32 %v643, %v726
        %v728 = vpop.f32.mrb[0].mxu0
        %729 = vdwg.mxu0
        %v730 = vmax.f32 %v712, 0.0
        %v731 = vmax.f32 %v717, 0.0
        %v732 = vmax.f32 %v722, 0.0
        %v733 = vmax.f32 %v727, 0.0
        %v734 = vld [vmem:[%s432] sm:$0xff]
        %v735 = vld [vmem:[%s432 + $0x8] sm:$0xff]
        %v736 = vld [vmem:[%s432 + $0x10] sm:$0xff]
        %v737 = vld [vmem:[%s432 + $0x18] sm:$0xff]
        %v738 = vld [vmem:[%s432 + $0x20] sm:$0xff]
        %v739 = vld [vmem:[%s432 + $0x28] sm:$0xff]
        %v740 = vld [vmem:[%s432 + $0x30] sm:$0xff]
        %v741 = vld [vmem:[%s432 + $0x38] sm:$0xff]
        %v742 = vld [vmem:[%s432 + $0x40] sm:$0xff]
        %v743 = vld [vmem:[%s432 + $0x48] sm:$0xff]
        %v744 = vld [vmem:[%s432 + $0x50] sm:$0xff]
        %v745 = vld [vmem:[%s432 + $0x58] sm:$0xff]
        %v746 = vld [vmem:[%s432 + $0x60] sm:$0xff]
        %v747 = vld [vmem:[%s432 + $0x68] sm:$0xff]
        %v748 = vld [vmem:[%s432 + $0x70] sm:$0xff]
        %v749 = vld [vmem:[%s432 + $0x78] sm:$0xff]
        %v750 = vld [vmem:[%s489] sm:$0x1]
        %v752 = vlaneseq
        %v753 = vshrl.u32 %v752, 7
        %v754 = vsub.s32 0, %v753
        %v755 = vrot.slane %v750, %v754
        %757 = vmatprep.subr.mxu0 0.0
        %758 = vmatpush1.msra.mxu0 %v734
        %759 = vmatprep.subr.mxu0 0.0
        %760 = vmatpush1.msra.mxu0 %v735
        %761 = vmatprep.subr.mxu0 0.0
        %762 = vmatpush1.msra.mxu0 %v736
        %763 = vmatprep.subr.mxu0 0.0
        %764 = vmatpush1.msra.mxu0 %v737
        %765 = vmatprep.subr.mxu0 0.0
        %766 = vmatpush1.msra.mxu0 %v738
        %767 = vmatprep.subr.mxu0 0.0
        %768 = vmatpush1.msra.mxu0 %v739
        %769 = vmatprep.subr.mxu0 0.0
        %770 = vmatpush1.msra.mxu0 %v740
        %771 = vmatprep.subr.mxu0 0.0
        %772 = vmatpush1.msra.mxu0 %v741
        %773 = vmatprep.subr.mxu0 0.0
        %774 = vmatpush1.msra.mxu0 %v742
        %775 = vmatprep.subr.mxu0 0.0
        %776 = vmatpush1.msra.mxu0 %v743
        %777 = vmatprep.subr.mxu0 0.0
        %778 = vmatpush1.msra.mxu0 %v744
        %779 = vmatprep.subr.mxu0 0.0
        %780 = vmatpush1.msra.mxu0 %v745
        %781 = vmatprep.subr.mxu0 0.0
        %782 = vmatpush1.msra.mxu0 %v746
        %783 = vmatprep.subr.mxu0 0.0
        %784 = vmatpush1.msra.mxu0 %v747
        %785 = vmatprep.subr.mxu0 0.0
        %786 = vmatpush1.msra.mxu0 %v748
        %787 = vmatprep.subr.mxu0 0.0
        %788 = vmatpush1.msra.mxu0 %v749
        %789 = vmatprep.subr.mxu0 0.0
        %790 = vmatpush1.msra.mxu0 0.0
        %791 = vmatprep.subr.mxu0 0.0
        %792 = vmatpush1.msra.mxu0 0.0
        %793 = vmatprep.subr.mxu0 0.0
        %794 = vmatpush1.msra.mxu0 0.0
        %795 = vmatprep.subr.mxu0 0.0
        %796 = vmatpush1.msra.mxu0 0.0
        %797 = vmatprep.subr.mxu0 0.0
        %798 = vmatpush1.msra.mxu0 0.0
        %799 = vmatprep.subr.mxu0 0.0
        %800 = vmatpush1.msra.mxu0 0.0
        %801 = vmatprep.subr.mxu0 0.0
        %802 = vmatpush1.msra.mxu0 0.0
        %803 = vmatprep.subr.mxu0 0.0
        %804 = vmatpush1.msra.mxu0 0.0
        %805 = vmatprep.subr.mxu0 0.0
        %806 = vmatpush1.msra.mxu0 0.0
        %807 = vmatprep.subr.mxu0 0.0
        %808 = vmatpush1.msra.mxu0 0.0
        %809 = vmatprep.subr.mxu0 0.0
        %810 = vmatpush1.msra.mxu0 0.0
        %811 = vmatprep.subr.mxu0 0.0
        %812 = vmatpush1.msra.mxu0 0.0
        %813 = vmatprep.subr.mxu0 0.0
        %814 = vmatpush1.msra.mxu0 0.0
        %815 = vmatprep.subr.mxu0 0.0
        %816 = vmatpush1.msra.mxu0 0.0
        %817 = vmatprep.subr.mxu0 0.0
        %818 = vmatpush1.msra.mxu0 0.0
        %819 = vmatprep.subr.mxu0 0.0
        %820 = vmatpush1.msra.mxu0 0.0
        %821 = vmatprep.mubr.f32.mxu0 0.0
        %822 = vmatmul.mubr.f32.gmra.mrb[0].mxu0 %v730
        %v823 = vpop.f32.mrb[0].mxu0
        %v824 = vadd.f32 %v755, %v823
        %v825 = vpop.f32.mrb[0].mxu0
        %826 = vmatprep.mubr.f32.mxu0 0.0
        %827 = vmatmul.mubr.f32.gmra.mrb[0].mxu0 %v731
        %v828 = vpop.f32.mrb[0].mxu0
        %v829 = vadd.f32 %v755, %v828
        %v830 = vpop.f32.mrb[0].mxu0
        %831 = vmatprep.mubr.f32.mxu0 0.0
        %832 = vmatmul.mubr.f32.gmra.mrb[0].mxu0 %v732
        %v833 = vpop.f32.mrb[0].mxu0
        %v834 = vadd.f32 %v755, %v833
        %v835 = vpop.f32.mrb[0].mxu0
        %836 = vmatprep.mubr.f32.mxu0 0.0
        %837 = vmatmul.mubr.f32.gmra.mrb[0].mxu0 %v733
        %v838 = vpop.f32.mrb[0].mxu0
        %v839 = vadd.f32 %v755, %v838
        %v840 = vpop.f32.mrb[0].mxu0
        %841 = vdwg.mxu0
        %v842 = vlaneseq
        %v843 = vshrl.u32 %v842, 7
        %v844 = vadd.s32 %v843, 8
        %v845 = vadd.s32 %v843, 16
        %v846 = vadd.s32 %v843, 24
        %vm847 = vcmp.lt.s32.totalorder %v843, 30
        %vm848 = vcmp.lt.s32.totalorder %v844, 30
        %vm849 = vcmp.lt.s32.totalorder %v845, 30
        %vm850 = vcmp.lt.s32.totalorder %v846, 30
        %v851 = vsel %vm847, 1, 0
        %v852 = vsel %vm848, 1, 0
        %v853 = vsel %vm849, 1, 0
        %v854 = vsel %vm850, 1, 0
        %v855 = vcvt.s32.f32 %v851
        %v856 = vcvt.s32.f32 %v852
        %v857 = vcvt.s32.f32 %v853
        %v858 = vcvt.s32.f32 %v854
        %v859 = vmul.f32 %v824, %v855
        %v860 = vmul.f32 %v829, %v856
        %v861 = vmul.f32 %v834, %v857
        %v862 = vmul.f32 %v839, %v858
        %v863 = vadd.f32 %v859, %v860
        %v864 = vadd.f32 %v863, %v861
        %v865 = vadd.f32 %v864, %v862
        %v866 = vrot.slane %v865, 4
        %v867 = vadd.f32 %v865, %v866
        %v868 = vrot.slane %v867, 2
        %v869 = vadd.f32 %v867, %v868
        %v870 = vrot.slane %v869, 1
        %v871 = vadd.f32 %v869, %v870
        %v872 = vmul.f32 %v871, 0.033333335
        %v873 = vsub.f32 %v824, %v872
        %v874 = vsub.f32 %v829, %v872
        %v875 = vsub.f32 %v834, %v872
        %v876 = vsub.f32 %v839, %v872
        %v877 = vmul.f32 %v873, %v873
        %v878 = vmul.f32 %v874, %v874
        %v879 = vmul.f32 %v875, %v875
        %v880 = vmul.f32 %v876, %v876
        %v881 = vmul.f32 %v877, %v855
        %v882 = vmul.f32 %v878, %v856
        %v883 = vmul.f32 %v879, %v857
        %v884 = vmul.f32 %v880, %v858
        %v885 = vadd.f32 %v881, %v882
        %v886 = vadd.f32 %v885, %v883
        %v887 = vadd.f32 %v886, %v884
        %v888 = vrot.slane %v887, 4
        %v889 = vadd.f32 %v887, %v888
        %v890 = vrot.slane %v889, 2
        %v891 = vadd.f32 %v889, %v890
        %v892 = vrot.slane %v891, 1
        %v893 = vadd.f32 %v891, %v892
        %v894 = vmul.f32 %v893, 0.033333335
        %v895 = vadd.f32 %v894, 1e-05
        %v896 = vrsqrt.pop %v895
        %v897 = vmul.f32 %v873, %v896
        %v898 = vmul.f32 %v874, %v896
        %v899 = vmul.f32 %v875, %v896
        %v900 = vmul.f32 %v876, %v896
        %v901 = vld [vmem:[%s492] sm:$0x1]
        %v903 = vlaneseq
        %v904 = vshrl.u32 %v903, 7
        %v905 = vsub.s32 0, %v904
        %v906 = vrot.slane %v901, %v905
        %v908 = vmul.f32 %v897, %v906
        %v909 = vmul.f32 %v898, %v906
        %v910 = vmul.f32 %v899, %v906
        %v911 = vmul.f32 %v900, %v906
        %v912 = vld [vmem:[%s495] sm:$0x1]
        %v914 = vlaneseq
        %v915 = vshrl.u32 %v914, 7
        %v916 = vsub.s32 0, %v915
        %v917 = vrot.slane %v912, %v916
        %v919 = vadd.f32 %v908, %v917
        %v920 = vadd.f32 %v909, %v917
        %v921 = vadd.f32 %v910, %v917
        %v922 = vadd.f32 %v911, %v917
        %v923 = vmul.f32 %v919, %v855
        %v924 = vmul.f32 %v920, %v856
        %v925 = vmul.f32 %v921, %v857
        %v926 = vmul.f32 %v922, %v858
        %927 = vst [vmem:[#allocation11] sm:$0xff] %v923
        %928 = vst [vmem:[#allocation11 + $0x8] sm:$0xff] %v924
        %929 = vst [vmem:[#allocation11 + $0x10] sm:$0xff] %v925
        %930 = vst [vmem:[#allocation11 + $0x18] sm:$0xff] %v926
        %v931 = vmax.f32 %v923, 0.0
        %v932 = vmax.f32 %v924, 0.0
        %v933 = vmax.f32 %v925, 0.0
        %v934 = vmax.f32 %v926, 0.0
        %935 = vst [vmem:[#allocation2] sm:$0xff] %v931
        %936 = vst [vmem:[#allocation2 + $0x8] sm:$0xff] %v932
        %937 = vst [vmem:[#allocation2 + $0x10] sm:$0xff] %v933
        %938 = vst [vmem:[#allocation2 + $0x18] sm:$0xff] %v934
        // Predicated region
        $region81: #{tpu_custom_call.1} parent=55 // pred_check
          %p939 = pneg %p260
        $region82: #{tpu_custom_call.1} parent=55 // pred_check_branch
          %941 = sbr.rel (%p939) target = $region84
        $region83: #{tpu_custom_call.1} parent=55 // pred_region
          %s943 = ssub.s32 512, 512
          %944 = vsyncadd [#allocation5], %s943
          %s945 = sshll.u32 [#allocation11], 4
          %s946 = int_to_ptr.vmem [resolvable:$true] %s945
          %951 = dma.vmem_to_hbm [thread:$0]  %s946, 512, %s9, [#allocation5], 128, 128, 8
        $region84: #{tpu_custom_call.1} parent=55 // pred_fallthru
          _
        // Predicated region
        $region85: #{tpu_custom_call.1} parent=55 // pred_check
          %p952 = pneg %p260
        $region86: #{tpu_custom_call.1} parent=55 // pred_check_branch
          %954 = sbr.rel (%p952) target = $region88
        $region87: #{tpu_custom_call.1} parent=55 // pred_region
          %955 = dma.done [#allocation5], 512
        $region88: #{tpu_custom_call.1} parent=55 // pred_fallthru
          _
      $region56: #{tpu_custom_call.1} parent=5 // pred_fallthru
        _
      %p956 = scmp.le.s32.totalorder 2, %s18
      // Predicated region
      $region89: #{tpu_custom_call.1} parent=5 // pred_check
        %p957 = pneg %p956
      $region90: #{tpu_custom_call.1} parent=5 // pred_check_branch
        %959 = sbr.rel (%p957) target = $region92
      $region91: #{tpu_custom_call.1} parent=5 // pred_region
        %s960 = ssub.s32 %s18, 2
      $region92: #{tpu_custom_call.1} parent=5 // pred_fallthru
        _
    $region6: #{tpu_custom_call.1} parent=1 // loop_footer
      %s22 = sadd.s32 1, %s18
    $region7: #{tpu_custom_call.1} parent=1 // loop_footer_branch
      %17 = sbr.rel target = $region3
    $region8: #{tpu_custom_call.1} parent=1 // loop_exit
      _
    %961 = vsyncpa [#allocation4], 1
    %s962 = scalar_lea.sflag [#allocation4], 1
    %963 = vsyncpa %s962, 1
    %964 = vsyncpa [#allocation7], 1
    %965 = vsyncpa [#allocation5], 1
    %s966 = scalar_lea.sflag [#allocation5], 1
    %967 = vsyncpa %s966, 1

</llo_original>
